<compile_context>
chip_gen: v5e
topology: v5e:2x2
jax: 0.10.0
libtpu: 0.0.40
codegen_flags: <defaults>
</compile_context>

<pallas_src>
import functools

import jax
import jax.numpy as jnp
from jax.experimental import pallas as pl
from jax.experimental.pallas import tpu as pltpu


# ----------------------------------------------------------------------------
# Kernel body (elementwise, shape-agnostic: works for 1-D and 2-D blocks).
# ----------------------------------------------------------------------------
def _sigmoid_kernel(x_ref, o_ref, *, compute_dtype):
    x = x_ref[...].astype(compute_dtype)
    half = jnp.asarray(0.5, dtype=compute_dtype)
    # sigmoid(x) = 0.5 * tanh(x / 2) + 0.5 : one EUP transcendental per element
    # (vs exp + reciprocal); the mul/add ride the VPU slots for free.
    y = half * jnp.tanh(x * half) + half
    o_ref[...] = y.astype(o_ref.dtype)


# ----------------------------------------------------------------------------
# Hardware-awareness helpers (all fall back to safe defaults).
# ----------------------------------------------------------------------------
def _device_kind() -> str:
    try:
        return jax.local_devices()[0].device_kind.lower()
    except Exception:
        return ""


def _vmem_capacity_bytes() -> int:
    try:
        cap = int(pltpu.get_tpu_info().vmem_capacity_bytes)
        if cap > 0:
            return cap
    except Exception:
        pass
    return 64 << 20  # conservative: v7x per-TC VMEM (smallest current gen)


def _chip_has_bf16_vpu() -> bool:
    kind = _device_kind()
    if not kind:
        return False
    # v5e and older have f32-only VPU/EUP; v6e and newer handle bf16 natively.
    return not any(tag in kind for tag in ("v2", "v3", "v4", "v5"))


def _is_multi_tensorcore_chip() -> bool:
    return "v7" in _device_kind()


def _compiler_params(grid, block_bytes, vmem_cap):
    # 1 input + 1 output, double-buffered by the BlockSpec pipeline => ~4 live
    # block buffers.  Raise the scoped VMEM limit to cover them with headroom.
    vmem_limit = int(min(vmem_cap // 2, max(32 << 20, 4 * block_bytes + (8 << 20))))
    if _is_multi_tensorcore_chip() and grid[0] >= 2:
        dim_sem = (pltpu.CORE_PARALLEL,)  # split the stream across both TCs (v7x)
    else:
        dim_sem = ("parallel",)           # independent blocks; no-op on 1-TC chips
    return pltpu.CompilerParams(
        dimension_semantics=dim_sem,
        vmem_limit_bytes=vmem_limit,
    )


def _pick_lane(total: int, sub: int):
    """Widest lane-dense last dim (multiple of 128).  Prefer candidates that
    also make the row count a multiple of the dtype's sublane tile; fall back
    to any lane-divisible choice; return None if no 2-D reshape is possible."""
    for cand in (1024, 512, 256, 128):
        if total % (sub * cand) == 0:
            return cand
    for cand in (1024, 512, 256, 128):
        if total % cand == 0:
            return cand
    return None


# ----------------------------------------------------------------------------
# Forward pass.
# ----------------------------------------------------------------------------
def dm_forward(x: jax.Array) -> jax.Array:
    """Applies elementwise sigmoid to a tensor via a tiled Pallas TPU kernel."""
    orig_shape = x.shape
    dtype = x.dtype
    total = int(x.size)
    if total == 0:
        return x

    itemsize = jnp.dtype(dtype).itemsize
    # Sublane tile for this dtype: 8 rows (32-bit), 16 (16-bit), 32 (8-bit).
    sub = 8 * max(1, 4 // itemsize)

    # Compute dtype: native bf16 on chips with bf16 VPU/EUP, otherwise f32.
    if dtype == jnp.bfloat16 and _chip_has_bf16_vpu():
        compute_dtype = jnp.bfloat16
    else:
        compute_dtype = jnp.float32
    kernel = functools.partial(_sigmoid_kernel, compute_dtype=compute_dtype)

    # Generation-aware block budget (bytes per block buffer): 4-8 MiB.
    vmem_cap = _vmem_capacity_bytes()
    block_budget = min(8 << 20, max(1 << 20, vmem_cap // 16))

    lane = _pick_lane(total, sub)

    if lane is not None:
        # ------------------------- 2-D lane-dense path -----------------------
        rows = total // lane
        x2d = x.reshape(rows, lane)
        bytes_per_row = lane * itemsize
        target_rows = max(sub, (block_budget // bytes_per_row) // sub * sub)
        if rows <= target_rows:
            tr = rows
        else:
            tr = target_rows
            if rows % tr != 0:
                # Prefer a divisor of rows near the target so every grid step
                # is a full, unmasked (tr, lane) tile.
                lo = max(sub, tr // 2)
                for cand in range(tr, lo - 1, -sub):
                    if rows % cand == 0:
                        tr = cand
                        break
        grid = (pl.cdiv(rows, tr),)
        block_bytes = tr * bytes_per_row

        out2d = pl.pallas_call(
            kernel,
            out_shape=jax.ShapeDtypeStruct((rows, lane), dtype),
            grid_spec=pltpu.PrefetchScalarGridSpec(
                num_scalar_prefetch=0,
                grid=grid,
                in_specs=[pl.BlockSpec((tr, lane), lambda i: (i, 0))],
                out_specs=pl.BlockSpec((tr, lane), lambda i: (i, 0)),
            ),
            compiler_params=_compiler_params(grid, block_bytes, vmem_cap),
        )(x2d)
        return out2d.reshape(orig_shape)

    # --------------------- flat 1-D path (ragged sizes) ----------------------
    # No padding / slicing of the full tensor: Pallas clips the final partial
    # block's DMAs, so HBM traffic stays at 1 read + 1 write.
    unit = sub * 128
    x1d = x.reshape(total)
    if total <= unit:
        block_elems = total  # full-array block (allowed: equals the array dim)
    else:
        elems_budget = max(unit, (block_budget // itemsize) // unit * unit)
        block_elems = min(elems_budget, pl.cdiv(total, unit) * unit)
    grid = (pl.cdiv(total, block_elems),)
    block_bytes = block_elems * itemsize

    out1d = pl.pallas_call(
        kernel,
        out_shape=jax.ShapeDtypeStruct((total,), dtype),
        grid_spec=pltpu.PrefetchScalarGridSpec(
            num_scalar_prefetch=0,
            grid=grid,
            in_specs=[pl.BlockSpec((block_elems,), lambda i: (i,))],
            out_specs=pl.BlockSpec((block_elems,), lambda i: (i,)),
        ),
        compiler_params=_compiler_params(grid, block_bytes, vmem_cap),
    )(x1d)
    return out1d.reshape(orig_shape)


if __name__ == "__main__":
    key = jax.random.PRNGKey(0)
    k0, k1, k2, k3 = jax.random.split(key, 4)

    # Aligned NCHW-style input (2048 elems -> dense 2-D fast path, single tile).
    x = jax.random.normal(k0, (2, 4, 16, 16), dtype=jnp.float32)
    y = jax.block_until_ready(dm_forward(x))
    assert y.shape == x.shape and y.dtype == x.dtype
    assert jnp.allclose(y, jax.nn.sigmoid(x), atol=1e-6, rtol=1e-6)

    # Tiny unaligned input matching torch.reshape(input, (-1, 1, 2, 2)) in the
    # original script (12 elems -> ragged 1-D path, no pad / slice passes).
    x_small = jax.random.normal(k1, (3, 1, 2, 2), dtype=jnp.float32)
    y_small = jax.block_until_ready(dm_forward(x_small))
    assert y_small.shape == x_small.shape and y_small.dtype == x_small.dtype
    assert jnp.allclose(y_small, jax.nn.sigmoid(x_small), atol=1e-6, rtol=1e-6)

    # Odd-sized input (3465 elems): exercises the clipped final 1-D block.
    x_odd = jax.random.normal(k2, (5, 3, 33, 7), dtype=jnp.float32)
    y_odd = jax.block_until_ready(dm_forward(x_odd))
    assert jnp.allclose(y_odd, jax.nn.sigmoid(x_odd), atol=1e-6, rtol=1e-6)

    # bf16 input: native bf16 compute on v6e+ (f32 upcast on older chips).
    x_bf16 = jax.random.normal(k3, (2, 4, 16, 16), dtype=jnp.bfloat16)
    y_bf16 = jax.block_until_ready(dm_forward(x_bf16))
    ref_bf16 = jax.nn.sigmoid(x_bf16.astype(jnp.float32)).astype(jnp.bfloat16)
    assert y_bf16.shape == x_bf16.shape and y_bf16.dtype == jnp.bfloat16
    assert jnp.allclose(y_bf16.astype(jnp.float32), ref_bf16.astype(jnp.float32),
                        atol=2e-2, rtol=2e-2)

    print("KERNEL_OK")
</pallas_src>

<mosaic_0001>
module attributes {stable_mosaic.version = 11 : i64} {
  func.func @_sigmoid_kernel(%arg0: i32, %arg1: memref<8x256xf32, #tpu.memory_space<vmem>>, %arg2: memref<8x256xf32, #tpu.memory_space<vmem>>) attributes {dimension_semantics = [#tpu.dimension_semantics<parallel>], iteration_bounds = array<i64: 1>, scalar_prefetch = 0 : i64, scratch_operands = 0 : i64, tpu.core_type = #tpu.core_type<tc>, window_params = [{transform_indices = @transform_0, window_bounds = array<i64: 8, 256>}, {transform_indices = @transform_1, window_bounds = array<i64: 8, 256>}]} {
    %c0 = arith.constant 0 : index
    %c0_0 = arith.constant 0 : index
    %0 = vector.load %arg1[%c0, %c0_0] : memref<8x256xf32, #tpu.memory_space<vmem>>, vector<8x256xf32>
    %cst = arith.constant 5.000000e-01 : f32
    %1 = vector.broadcast %cst : f32 to vector<8x256xf32>
    %2 = arith.mulf %0, %1 : vector<8x256xf32>
    %3 = math.tanh %2 : vector<8x256xf32>
    %cst_1 = arith.constant 5.000000e-01 : f32
    %4 = vector.broadcast %cst_1 : f32 to vector<8x256xf32>
    %5 = arith.mulf %4, %3 : vector<8x256xf32>
    %cst_2 = arith.constant 5.000000e-01 : f32
    %6 = vector.broadcast %cst_2 : f32 to vector<8x256xf32>
    %7 = arith.addf %5, %6 : vector<8x256xf32>
    %c0_3 = arith.constant 0 : index
    %c0_4 = arith.constant 0 : index
    %8 = vector.load %arg2[%c0_3, %c0_4] : memref<8x256xf32, #tpu.memory_space<vmem>>, vector<8x256xf32>
    tpu.vector_store %arg2[%c0_3, %c0_4], %7 {strides = array<i32>} : memref<8x256xf32, #tpu.memory_space<vmem>>, vector<8x256xf32>,
    return
  }
  func.func @transform_0(%arg0: i32) -> (i32, i32) {
    %c0_i32 = arith.constant 0 : i32
    %c0_i32_0 = arith.constant 0 : i32
    return %arg0, %c0_i32 : i32, i32
  }
  func.func @transform_1(%arg0: i32) -> (i32, i32) {
    %c0_i32 = arith.constant 0 : i32
    %c0_i32_0 = arith.constant 0 : i32
    return %arg0, %c0_i32 : i32, i32
  }
}

</mosaic_0001>

<llo_original>
// kernel: tpu_custom_call.1
$region0: #{tpu_custom_call.1}
  #allocation0 [shape = 'u32[]', space=smem, size = 0x4, offset = 0x4, fixed_abs, tag = 'smem constant byte address 0x4 - core index']
  #allocation1 [shape = 'u32[72,128]{1,0:T(1,128)}', space=vmem, size = 0x9000, scoped, tag = 'internal scratch']
  %s0 = inlined_call_operand.hbm [shape: f32[8,256], index: 0, kind: input, shape index: {}]
  %s1 = inlined_call_operand.hbm [shape: f32[8,256], index: 1, kind: output, shape index: {}]
  %s2 = sld [smem:[#allocation0]]
  $region18: #{tpu_custom_call.1} parent=0
    _
  %s4 = ssub.s32 1, %s2
  %s5 = scalar_select 0, %s4, %s2
  $region1: #{tpu_custom_call.1} parent=0
    #allocation2 [shape = 'u8[8192]{0}', space=vmem, size = 0x2000, scoped, tag = 'input window, operand 0, single buffered']
    #allocation3 [shape = 's32[1]{0}', space=sflag, size = 0x4, scoped, tag = 'scoped memory for tpu_custom_call.1']
    #allocation4 [shape = 's32[1]{0}', space=sflag, size = 0x4, scoped, tag = 'scoped memory for tpu_custom_call.1']
    #allocation5 [shape = 'u8[8192]{0}', space=vmem, size = 0x2000, scoped, tag = 'output window, operand 0, single buffered']
    %6 = vsyncpa [#allocation3], 0
    %7 = vsyncpa [#allocation4], 0
    // Predicated region
    $region2: #{tpu_custom_call.1} parent=1 // pred_check
      _
    $region3: #{tpu_custom_call.1} parent=1 // pred_check_branch
      %9 = sbr.rel (0) target = $region5
    $region4: #{tpu_custom_call.1} parent=1 // pred_region
      %11 = vsyncadd [#allocation3], 0
      %s13 = sshll.u32 %s0, 4
      %s14 = int_to_ptr.hbm [resolvable:$true] %s13
      %s15 = sshll.u32 [#allocation2], 4
      %s16 = int_to_ptr.vmem [resolvable:$true] %s15
      %18 = dma.hbm_to_vmem [thread:$0]  %s14, 256, %s16, [#allocation3]
    $region5: #{tpu_custom_call.1} parent=1 // pred_fallthru
      _
    // Predicated region
    $region6: #{tpu_custom_call.1} parent=1 // pred_check
      _
    $region7: #{tpu_custom_call.1} parent=1 // pred_check_branch
      %20 = sbr.rel (0) target = $region9
    $region8: #{tpu_custom_call.1} parent=1 // pred_region
      %22 = dma.done [#allocation3], 256
    $region9: #{tpu_custom_call.1} parent=1 // pred_fallthru
      _
    %v23 = vld [vmem:[#allocation2] sm:$0xff]
    %v24 = vld [vmem:[#allocation2 + $0x8] sm:$0xff]
    %v25 = vmul.f32 %v23, 0.5
    %v26 = vmul.f32 %v24, 0.5
    %v27 = vtanh.pop %v25
    %v28 = vtanh.pop %v26
    %v29 = vmul.f32 %v27, 0.5
    %v30 = vmul.f32 %v28, 0.5
    %v31 = vadd.f32 %v29, 0.5
    %v32 = vadd.f32 %v30, 0.5
    %33 = vst [vmem:[#allocation5] sm:$0xff] %v31
    %34 = vst [vmem:[#allocation5 + $0x8] sm:$0xff] %v32
    // Predicated region
    $region10: #{tpu_custom_call.1} parent=1 // pred_check
      _
    $region11: #{tpu_custom_call.1} parent=1 // pred_check_branch
      %36 = sbr.rel (0) target = $region13
    $region12: #{tpu_custom_call.1} parent=1 // pred_region
      %38 = vsyncadd [#allocation4], 0
      %s40 = sshll.u32 [#allocation5], 4
      %s41 = int_to_ptr.vmem [resolvable:$true] %s40
      %s42 = sshll.u32 %s1, 4
      %s43 = int_to_ptr.hbm [resolvable:$true] %s42
      %45 = dma.vmem_to_hbm [thread:$0]  %s41, 256, %s43, [#allocation4]
    $region13: #{tpu_custom_call.1} parent=1 // pred_fallthru
      _
    // Predicated region
    $region14: #{tpu_custom_call.1} parent=1 // pred_check
      _
    $region15: #{tpu_custom_call.1} parent=1 // pred_check_branch
      %47 = sbr.rel (0) target = $region17
    $region16: #{tpu_custom_call.1} parent=1 // pred_region
      %49 = dma.done [#allocation4], 256
    $region17: #{tpu_custom_call.1} parent=1 // pred_fallthru
      _
    %50 = vsyncpa [#allocation3], 1
    %51 = vsyncpa [#allocation4], 1

</llo_original>
